<compile_context>
chip_gen: v5e
topology: v5e:2x2
jax: 0.10.0
libtpu: 0.0.40
codegen_flags: <defaults>
</compile_context>

<pallas_src>
import jax
import jax.numpy as jnp
from jax.experimental import pallas as pl
from jax.experimental.pallas import tpu as pltpu

LANE = 128
_TARGET_BLOCK_BYTES = 2 << 20      # per-stream, per-buffer VMEM target
_VMEM_LIMIT_BYTES = 32 << 20       # safe on v5e/v6e (128 MiB) and v7x (64 MiB)
_SMALL_N_FALLBACK = 1 << 18        # below this, plain fused jnp is faster


def _mulsub_kernel(a_ref, b_ref, c_ref, d_ref, o_ref):
    # One VPU tile: out = a*b - c*d  (3 VALU ops vs 5 VMEM streams -> mem-bound)
    o_ref[...] = a_ref[...] * b_ref[...] - c_ref[...] * d_ref[...]


def mul_sub(input1, input2, input3, input4, *, min_pallas_elems=_SMALL_N_FALLBACK):
    # Match torch's broadcasting / type-promotion for a*b - c*d.
    out_dtype = jnp.result_type(input1, input2, input3, input4)
    out_shape = jnp.broadcast_shapes(input1.shape, input2.shape,
                                     input3.shape, input4.shape)
    xs = [jnp.broadcast_to(x, out_shape).astype(out_dtype)
          for x in (input1, input2, input3, input4)]

    n = 1
    for dim in out_shape:
        n *= dim

    # Small-tensor fallback: XLA fuses this into a single elementwise kernel.
    if n == 0 or n < min_pallas_elems:
        return xs[0] * xs[1] - xs[2] * xs[3]

    itemsize = jnp.dtype(out_dtype).itemsize

    # Lane-dense (rows, 128) slab.  Pad only up to the next multiple of 128;
    # when n is already lane-aligned this is a pure reshape (no extra HBM
    # traffic).  Pallas masks the ragged last row-block itself.
    rows = pl.cdiv(n, LANE)
    padded = rows * LANE
    pad = padded - n

    def prep(x):
        x = x.reshape(-1)
        if pad:
            # TODO(synk): a masked store of the final block inside the kernel
            # (memory_space=pl.ANY tail handling) would remove even this
            # <=127-element pad copy.
            x = jnp.pad(x, (0, pad))
        return x.reshape(rows, LANE)

    a, b, c, d = (prep(x) for x in xs)

    # Dtype-scaled block rows (~2 MiB/buffer): 4096 for f32, 8192 for bf16, ...
    block_rows = max(8, _TARGET_BLOCK_BYTES // (LANE * itemsize))
    block_rows = min(rows, block_rows)          # full-dim block is always legal
    grid = (pl.cdiv(rows, block_rows),)

    spec = pl.BlockSpec((block_rows, LANE), lambda i: (i, 0))

    out2d = pl.pallas_call(
        _mulsub_kernel,
        out_shape=jax.ShapeDtypeStruct((rows, LANE), out_dtype),
        grid=grid,
        in_specs=[spec] * 4,
        out_specs=spec,
        compiler_params=pltpu.CompilerParams(
            dimension_semantics=("parallel",),
            vmem_limit_bytes=_VMEM_LIMIT_BYTES,
        ),
        cost_estimate=pl.CostEstimate(
            flops=3 * padded,                       # 2 muls + 1 sub per element
            transcendentals=0,
            bytes_accessed=5 * padded * itemsize,   # 4 reads + 1 write
        ),
    )(a, b, c, d)

    out_flat = out2d.reshape(-1)
    if pad:
        out_flat = out_flat[:n]
    return out_flat.reshape(out_shape)


if __name__ == "__main__":
    key = jax.random.PRNGKey(0)
    k1, k2, k3, k4 = jax.random.split(key, 4)

    # 1) Module-spec shape, forced through the Pallas path.
    shape = (2, 4, 16, 16)
    a = jax.random.normal(k1, shape, dtype=jnp.float32)
    b = jax.random.normal(k2, shape, dtype=jnp.float32)
    c = jax.random.normal(k3, shape, dtype=jnp.float32)
    d = jax.random.normal(k4, shape, dtype=jnp.float32)
    out = jax.block_until_ready(mul_sub(a, b, c, d, min_pallas_elems=0))
    ref = a * b - c * d
    assert out.shape == ref.shape and out.dtype == ref.dtype
    assert jnp.allclose(out, ref, atol=1e-6, rtol=1e-6)

    # 2) Default path at the same shape (small-n fallback) must also match.
    out_fb = jax.block_until_ready(mul_sub(a, b, c, d))
    assert jnp.allclose(out_fb, ref, atol=1e-6, rtol=1e-6)

    # 3) Non-lane-aligned element count exercises the minimal pad/slice path.
    shape_u = (3, 5, 7)
    au = jax.random.normal(k1, shape_u, dtype=jnp.float32)
    bu = jax.random.normal(k2, shape_u, dtype=jnp.float32)
    cu = jax.random.normal(k3, shape_u, dtype=jnp.float32)
    du = jax.random.normal(k4, shape_u, dtype=jnp.float32)
    out_u = jax.block_until_ready(mul_sub(au, bu, cu, du, min_pallas_elems=0))
    assert jnp.allclose(out_u, au * bu - cu * du, atol=1e-6, rtol=1e-6)

    # 4) Modest larger case (1M elems, f32) exercising a multi-step grid via
    #    the default (non-fallback) Pallas path.
    shape_l = (4, 8, 256, 128)
    al = jax.random.normal(k1, shape_l, dtype=jnp.float32)
    bl = jax.random.normal(k2, shape_l, dtype=jnp.float32)
    cl = jax.random.normal(k3, shape_l, dtype=jnp.float32)
    dl = jax.random.normal(k4, shape_l, dtype=jnp.float32)
    out_l = jax.block_until_ready(mul_sub(al, bl, cl, dl))
    assert jnp.allclose(out_l, al * bl - cl * dl, atol=1e-6, rtol=1e-6)

    print("KERNEL_OK")
</pallas_src>

<mosaic_0001>
module attributes {stable_mosaic.version = 11 : i64} {
  func.func @_mulsub_kernel(%arg0: i32, %arg1: memref<16x128xf32, #tpu.memory_space<vmem>>, %arg2: memref<16x128xf32, #tpu.memory_space<vmem>>, %arg3: memref<16x128xf32, #tpu.memory_space<vmem>>, %arg4: memref<16x128xf32, #tpu.memory_space<vmem>>, %arg5: memref<16x128xf32, #tpu.memory_space<vmem>>) attributes {dimension_semantics = [#tpu.dimension_semantics<parallel>], iteration_bounds = array<i64: 1>, scalar_prefetch = 0 : i64, scratch_operands = 0 : i64, tpu.core_type = #tpu.core_type<tc>, window_params = [{transform_indices = @transform_0, window_bounds = array<i64: 16, 128>}, {transform_indices = @transform_1, window_bounds = array<i64: 16, 128>}, {transform_indices = @transform_2, window_bounds = array<i64: 16, 128>}, {transform_indices = @transform_3, window_bounds = array<i64: 16, 128>}, {transform_indices = @transform_4, window_bounds = array<i64: 16, 128>}]} {
    %c0 = arith.constant 0 : index
    %c0_0 = arith.constant 0 : index
    %0 = vector.load %arg1[%c0, %c0_0] : memref<16x128xf32, #tpu.memory_space<vmem>>, vector<16x128xf32>
    %c0_1 = arith.constant 0 : index
    %c0_2 = arith.constant 0 : index
    %1 = vector.load %arg2[%c0_1, %c0_2] : memref<16x128xf32, #tpu.memory_space<vmem>>, vector<16x128xf32>
    %2 = arith.mulf %0, %1 : vector<16x128xf32>
    %c0_3 = arith.constant 0 : index
    %c0_4 = arith.constant 0 : index
    %3 = vector.load %arg3[%c0_3, %c0_4] : memref<16x128xf32, #tpu.memory_space<vmem>>, vector<16x128xf32>
    %c0_5 = arith.constant 0 : index
    %c0_6 = arith.constant 0 : index
    %4 = vector.load %arg4[%c0_5, %c0_6] : memref<16x128xf32, #tpu.memory_space<vmem>>, vector<16x128xf32>
    %5 = arith.mulf %3, %4 : vector<16x128xf32>
    %6 = arith.subf %2, %5 : vector<16x128xf32>
    %c0_7 = arith.constant 0 : index
    %c0_8 = arith.constant 0 : index
    %7 = vector.load %arg5[%c0_7, %c0_8] : memref<16x128xf32, #tpu.memory_space<vmem>>, vector<16x128xf32>
    tpu.vector_store %arg5[%c0_7, %c0_8], %6 {strides = array<i32>} : memref<16x128xf32, #tpu.memory_space<vmem>>, vector<16x128xf32>,
    return
  }
  func.func @transform_0(%arg0: i32) -> (i32, i32) {
    %c0_i32 = arith.constant 0 : i32
    %c0_i32_0 = arith.constant 0 : i32
    return %arg0, %c0_i32 : i32, i32
  }
  func.func @transform_1(%arg0: i32) -> (i32, i32) {
    %c0_i32 = arith.constant 0 : i32
    %c0_i32_0 = arith.constant 0 : i32
    return %arg0, %c0_i32 : i32, i32
  }
  func.func @transform_2(%arg0: i32) -> (i32, i32) {
    %c0_i32 = arith.constant 0 : i32
    %c0_i32_0 = arith.constant 0 : i32
    return %arg0, %c0_i32 : i32, i32
  }
  func.func @transform_3(%arg0: i32) -> (i32, i32) {
    %c0_i32 = arith.constant 0 : i32
    %c0_i32_0 = arith.constant 0 : i32
    return %arg0, %c0_i32 : i32, i32
  }
  func.func @transform_4(%arg0: i32) -> (i32, i32) {
    %c0_i32 = arith.constant 0 : i32
    %c0_i32_0 = arith.constant 0 : i32
    return %arg0, %c0_i32 : i32, i32
  }
}

</mosaic_0001>

<llo_original>
// kernel: tpu_custom_call.1
$region0: #{tpu_custom_call.1}
  #allocation0 [shape = 'u32[]', space=smem, size = 0x4, offset = 0x4, fixed_abs, tag = 'smem constant byte address 0x4 - core index']
  #allocation1 [shape = 'u32[72,128]{1,0:T(1,128)}', space=vmem, size = 0x9000, scoped, tag = 'internal scratch']
  %s0 = inlined_call_operand.hbm [shape: f32[16,128], index: 0, kind: input, shape index: {}]
  %s1 = inlined_call_operand.hbm [shape: f32[16,128], index: 1, kind: input, shape index: {}]
  %s2 = inlined_call_operand.hbm [shape: f32[16,128], index: 2, kind: input, shape index: {}]
  %s3 = inlined_call_operand.hbm [shape: f32[16,128], index: 3, kind: input, shape index: {}]
  %s4 = inlined_call_operand.hbm [shape: f32[16,128], index: 4, kind: output, shape index: {}]
  %s5 = sld [smem:[#allocation0]]
  $region42: #{tpu_custom_call.1} parent=0
    _
  %s7 = ssub.s32 1, %s5
  %s8 = scalar_select 0, %s7, %s5
  $region1: #{tpu_custom_call.1} parent=0
    #allocation2 [shape = 'u8[8192]{0}', space=vmem, size = 0x2000, scoped, tag = 'input window, operand 0, single buffered']
    #allocation3 [shape = 's32[1]{0}', space=sflag, size = 0x4, scoped, tag = 'scoped memory for tpu_custom_call.1']
    #allocation4 [shape = 's32[1]{0}', space=sflag, size = 0x4, scoped, tag = 'scoped memory for tpu_custom_call.1']
    #allocation5 [shape = 'u8[8192]{0}', space=vmem, size = 0x2000, scoped, tag = 'input window, operand 1, single buffered']
    #allocation6 [shape = 's32[1]{0}', space=sflag, size = 0x4, scoped, tag = 'scoped memory for tpu_custom_call.1']
    #allocation7 [shape = 'u8[8192]{0}', space=vmem, size = 0x2000, scoped, tag = 'input window, operand 2, single buffered']
    #allocation8 [shape = 'u8[8192]{0}', space=vmem, size = 0x2000, scoped, tag = 'input window, operand 3, single buffered']
    #allocation9 [shape = 's32[1]{0}', space=sflag, size = 0x4, scoped, tag = 'scoped memory for tpu_custom_call.1']
    #allocation10 [shape = 'u8[8192]{0}', space=vmem, size = 0x2000, scoped, tag = 'output window, operand 0, single buffered']
    %9 = vsyncpa [#allocation3], 0
    %10 = vsyncpa [#allocation6], 0
    %11 = vsyncpa [#allocation9], 0
    %12 = vsyncpa [#allocation4], 0
    // Predicated region
    $region2: #{tpu_custom_call.1} parent=1 // pred_check
      _
    $region3: #{tpu_custom_call.1} parent=1 // pred_check_branch
      %14 = sbr.rel (0) target = $region5
    $region4: #{tpu_custom_call.1} parent=1 // pred_region
      %16 = vsyncadd [#allocation3], 0
      %s17 = sshll.u32 %s0, 4
      %s18 = int_to_ptr.hbm [resolvable:$true] %s17
      %s19 = sshll.u32 [#allocation2], 4
      %s20 = int_to_ptr.vmem [resolvable:$true] %s19
      %25 = dma.hbm_to_vmem [thread:$0]  %s18, 256, %s20, [#allocation3], 128, 128, 8
    $region5: #{tpu_custom_call.1} parent=1 // pred_fallthru
      _
    // Predicated region
    $region6: #{tpu_custom_call.1} parent=1 // pred_check
      _
    $region7: #{tpu_custom_call.1} parent=1 // pred_check_branch
      %27 = sbr.rel (0) target = $region9
    $region8: #{tpu_custom_call.1} parent=1 // pred_region
      %29 = vsyncadd [#allocation6], 0
      %s30 = sshll.u32 %s1, 4
      %s31 = int_to_ptr.hbm [resolvable:$true] %s30
      %s32 = sshll.u32 [#allocation5], 4
      %s33 = int_to_ptr.vmem [resolvable:$true] %s32
      %38 = dma.hbm_to_vmem [thread:$0]  %s31, 256, %s33, [#allocation6], 128, 128, 8
    $region9: #{tpu_custom_call.1} parent=1 // pred_fallthru
      _
    // Predicated region
    $region10: #{tpu_custom_call.1} parent=1 // pred_check
      _
    $region11: #{tpu_custom_call.1} parent=1 // pred_check_branch
      %40 = sbr.rel (0) target = $region13
    $region12: #{tpu_custom_call.1} parent=1 // pred_region
      %42 = vsyncadd [#allocation6], 0
      %s43 = sshll.u32 %s2, 4
      %s44 = int_to_ptr.hbm [resolvable:$true] %s43
      %s45 = sshll.u32 [#allocation7], 4
      %s46 = int_to_ptr.vmem [resolvable:$true] %s45
      %51 = dma.hbm_to_vmem [thread:$0]  %s44, 256, %s46, [#allocation6], 128, 128, 8
    $region13: #{tpu_custom_call.1} parent=1 // pred_fallthru
      _
    // Predicated region
    $region14: #{tpu_custom_call.1} parent=1 // pred_check
      _
    $region15: #{tpu_custom_call.1} parent=1 // pred_check_branch
      %53 = sbr.rel (0) target = $region17
    $region16: #{tpu_custom_call.1} parent=1 // pred_region
      %55 = vsyncadd [#allocation9], 0
      %s56 = sshll.u32 %s3, 4
      %s57 = int_to_ptr.hbm [resolvable:$true] %s56
      %s58 = sshll.u32 [#allocation8], 4
      %s59 = int_to_ptr.vmem [resolvable:$true] %s58
      %64 = dma.hbm_to_vmem [thread:$0]  %s57, 256, %s59, [#allocation9], 128, 128, 8
    $region17: #{tpu_custom_call.1} parent=1 // pred_fallthru
      _
    // Predicated region
    $region18: #{tpu_custom_call.1} parent=1 // pred_check
      _
    $region19: #{tpu_custom_call.1} parent=1 // pred_check_branch
      %66 = sbr.rel (0) target = $region21
    $region20: #{tpu_custom_call.1} parent=1 // pred_region
      %68 = dma.done [#allocation3], 256
    $region21: #{tpu_custom_call.1} parent=1 // pred_fallthru
      _
    // Predicated region
    $region22: #{tpu_custom_call.1} parent=1 // pred_check
      _
    $region23: #{tpu_custom_call.1} parent=1 // pred_check_branch
      %70 = sbr.rel (0) target = $region25
    $region24: #{tpu_custom_call.1} parent=1 // pred_region
      %72 = dma.done [#allocation6], 256
    $region25: #{tpu_custom_call.1} parent=1 // pred_fallthru
      _
    // Predicated region
    $region26: #{tpu_custom_call.1} parent=1 // pred_check
      _
    $region27: #{tpu_custom_call.1} parent=1 // pred_check_branch
      %74 = sbr.rel (0) target = $region29
    $region28: #{tpu_custom_call.1} parent=1 // pred_region
      %76 = dma.done [#allocation6], 256
    $region29: #{tpu_custom_call.1} parent=1 // pred_fallthru
      _
    // Predicated region
    $region30: #{tpu_custom_call.1} parent=1 // pred_check
      _
    $region31: #{tpu_custom_call.1} parent=1 // pred_check_branch
      %78 = sbr.rel (0) target = $region33
    $region32: #{tpu_custom_call.1} parent=1 // pred_region
      %80 = dma.done [#allocation9], 256
    $region33: #{tpu_custom_call.1} parent=1 // pred_fallthru
      _
    %v81 = vld [vmem:[#allocation2] sm:$0xff]
    %v82 = vld [vmem:[#allocation2 + $0x8] sm:$0xff]
    %v83 = vld [vmem:[#allocation5] sm:$0xff]
    %v84 = vld [vmem:[#allocation5 + $0x8] sm:$0xff]
    %v85 = vmul.f32 %v81, %v83
    %v86 = vmul.f32 %v82, %v84
    %v87 = vld [vmem:[#allocation7] sm:$0xff]
    %v88 = vld [vmem:[#allocation7 + $0x8] sm:$0xff]
    %v89 = vld [vmem:[#allocation8] sm:$0xff]
    %v90 = vld [vmem:[#allocation8 + $0x8] sm:$0xff]
    %v91 = vmul.f32 %v87, %v89
    %v92 = vmul.f32 %v88, %v90
    %v93 = vsub.f32 %v85, %v91
    %v94 = vsub.f32 %v86, %v92
    %95 = vst [vmem:[#allocation10] sm:$0xff] %v93
    %96 = vst [vmem:[#allocation10 + $0x8] sm:$0xff] %v94
    // Predicated region
    $region34: #{tpu_custom_call.1} parent=1 // pred_check
      _
    $region35: #{tpu_custom_call.1} parent=1 // pred_check_branch
      %98 = sbr.rel (0) target = $region37
    $region36: #{tpu_custom_call.1} parent=1 // pred_region
      %100 = vsyncadd [#allocation4], 0
      %s101 = sshll.u32 [#allocation10], 4
      %s102 = int_to_ptr.vmem [resolvable:$true] %s101
      %s103 = sshll.u32 %s4, 4
      %s104 = int_to_ptr.hbm [resolvable:$true] %s103
      %109 = dma.vmem_to_hbm [thread:$0]  %s102, 256, %s104, [#allocation4], 128, 128, 8
    $region37: #{tpu_custom_call.1} parent=1 // pred_fallthru
      _
    // Predicated region
    $region38: #{tpu_custom_call.1} parent=1 // pred_check
      _
    $region39: #{tpu_custom_call.1} parent=1 // pred_check_branch
      %111 = sbr.rel (0) target = $region41
    $region40: #{tpu_custom_call.1} parent=1 // pred_region
      %113 = dma.done [#allocation4], 256
    $region41: #{tpu_custom_call.1} parent=1 // pred_fallthru
      _
    %114 = vsyncpa [#allocation3], 1
    %115 = vsyncpa [#allocation6], 1
    %116 = vsyncpa [#allocation9], 1
    %117 = vsyncpa [#allocation4], 1

</llo_original>
